<compile_context>
chip_gen: v6e
topology: v6e:2x2x1
jax: 0.10.0
libtpu: 0.0.40
codegen_flags: <defaults>
</compile_context>

<pallas_src>
import math

import jax
import jax.numpy as jnp
from jax.experimental import pallas as pl
from jax.experimental.pallas import tpu as pltpu

# Finite "-inf": avoids NaN from (-inf) - (-inf) in the online softmax when a
# whole source tile is masked for some batch element (reference NaNs only in the
# degenerate fully-masked-sequence case, which real data never hits).
_NEG = -1e30


def _round_up(x, m):
    return (x + m - 1) // m * m


def _row_to_col(row):
    """(1, N) -> (N, 1) using only natively-supported ops (iota/compare/where/sum).

    Used to apply per-batch (lane-indexed) softmax statistics to the
    (batch-on-sublanes) context accumulator without relying on a 2-D transpose.
    """
    n = row.shape[1]
    rows = jax.lax.broadcasted_iota(jnp.int32, (n, n), 0)
    cols = jax.lax.broadcasted_iota(jnp.int32, (n, n), 1)
    return jnp.sum(jnp.where(rows == cols, row, 0.0), axis=1, keepdims=True)


def _bahdanau_kernel(q_ref, val_ref, mask_ref, wq_ref, wv_ref, nv_ref, b_ref,
                     ctx_ref, attn_ref, m_scr, l_scr, acc_scr):
    # q_ref:    (TB, Qd)     f32  query tile (batch-major)
    # val_ref:  (TS, TB, Dv) f32  value tile, fairseq time-major (no transpose)
    # mask_ref: (TS, TB)     f32  1.0 = padded
    # wq_ref:   (Qd, E) bf16, wv_ref: (Dv, E) bf16, nv_ref/b_ref: (1, E) f32
    # ctx_ref:  (TB, Dv) f32     written at the last source tile
    # attn_ref: (S_pad, TB) f32  resident across source tiles; holds raw scores,
    #                            normalized in place at the last source tile
    # m_scr/l_scr: (1, TB) f32, acc_scr: (TB, Dv) f32  online-softmax state
    TS, TB, Dv = val_ref.shape
    E = wq_ref.shape[1]
    s = pl.program_id(1)
    n_s = pl.num_programs(1)

    @pl.when(s == 0)
    def _():
        m_scr[...] = jnp.full_like(m_scr, _NEG)
        l_scr[...] = jnp.zeros_like(l_scr)
        acc_scr[...] = jnp.zeros_like(acc_scr)

    # --- projections on the MXU (bf16 inputs, f32 accumulation) --------------
    pq = jnp.dot(q_ref[...].astype(jnp.bfloat16), wq_ref[...],
                 preferred_element_type=jnp.float32)                   # (TB, E)
    val = val_ref[...]                                                 # (TS,TB,Dv)
    key = jnp.dot(val.astype(jnp.bfloat16).reshape(TS * TB, Dv), wv_ref[...],
                  preferred_element_type=jnp.float32).reshape(TS, TB, E)

    # --- additive (Bahdanau) score with pre-normalized v ---------------------
    #   score = sum_e normed_v[e] * tanh(pq + key + b)
    t = jnp.tanh(pq[None, :, :] + key + b_ref[...])                    # (TS,TB,E)
    scores = jnp.sum(nv_ref[...] * t, axis=-1)                         # (TS, TB)
    scores = jnp.where(mask_ref[...] > 0.5, _NEG, scores)

    # Stash raw scores into the resident attn output block (normalized at end).
    row0 = pl.multiple_of(s * TS, 8)
    attn_ref[pl.ds(row0, TS), :] = scores

    # --- online softmax state update ------------------------------------------
    m_prev = m_scr[...]                                                # (1, TB)
    m_new = jnp.maximum(m_prev, jnp.max(scores, axis=0, keepdims=True))
    alpha = jnp.exp(m_prev - m_new)                                    # (1, TB)
    p = jnp.exp(scores - m_new)                                        # (TS, TB)
    l_scr[...] = alpha * l_scr[...] + jnp.sum(p, axis=0, keepdims=True)
    m_scr[...] = m_new

    # --- context accumulation on the VPU (avoids TB separate M=1 MXU matmuls) -
    contrib = jnp.sum(p[:, :, None] * val, axis=0)                     # (TB, Dv)
    acc_scr[...] = _row_to_col(alpha) * acc_scr[...] + contrib

    # --- finalize at the last source tile --------------------------------------
    @pl.when(s == n_s - 1)
    def _():
        inv_l = pl.reciprocal(l_scr[...], approx=True)                 # (1, TB)
        attn_ref[...] = jnp.exp(attn_ref[...] - m_scr[...]) * inv_l
        ctx_ref[...] = (acc_scr[...] * _row_to_col(inv_l)).astype(ctx_ref.dtype)


def bahdanau_attention(query, value, key_padding_mask, params, *, s_tile=None):
    """query (B,Qd) f32, value (S,B,Dv) f32 time-major,
    key_padding_mask (S,B) bool (True = padded) or None.
    Returns (context (B,Dv), attn_scores (S,B), next_state (S,B))."""
    S, B, Dv = value.shape
    Qd = query.shape[1]
    E = params["wq"].shape[1]

    # Batch tile: fill the 8 sublanes, cap at 128 lanes (keeps the batch lane dim
    # either ==B_pad or 128-aligned, so attn stores stay lane-dense).  For
    # B >= 129 this yields >= 2 batch tiles which the "parallel" axis shards
    # across v7x's two TensorCores.
    TB = min(128, _round_up(max(B, 1), 8))
    B_pad = _round_up(B, TB)

    # Source tile: sized so one (TS, TB, Dv) f32 value block stays <= ~4 MiB,
    # which (with double-buffering + the (TS*TB, E) f32 key/tanh temporaries)
    # keeps the working set inside the explicit VMEM budget below (v7x: 64 MiB
    # physical).  `s_tile` overrides for testing the multi-tile path.
    row_bytes = TB * Dv * value.dtype.itemsize
    ts_cap = max(8, ((4 << 20) // max(row_bytes, 1)) // 8 * 8)
    if s_tile is not None:
        ts_cap = min(ts_cap, max(8, _round_up(int(s_tile), 8)))
    TS = min(_round_up(S, 8), ts_cap)
    S_pad = _round_up(S, TS)

    # Weight-norm of v (g * v / ||v||) hoisted out of the kernel (constant).
    vvec = params["v"]
    normed_v = (params["g"] * vvec /
                jnp.sqrt(jnp.sum(vvec * vvec))).astype(jnp.float32)     # (1, E)

    # Weights in bf16 for the MXU (f32 accumulation in-kernel).  Activations stay
    # f32 in HBM and are cast in-kernel: value is read exactly once, so a
    # wrapper-side cast would only add an extra full HBM pass over it.
    # (The constant-index weight specs could use pipeline_mode=pl.Buffered(1) to
    # save one spare buffer; skipped to keep lowering maximally portable.)
    wq = params["wq"].astype(jnp.bfloat16)
    wv = params["wv"].astype(jnp.bfloat16)
    bias = params["b"].astype(jnp.float32)

    q2 = query
    v3 = value                                   # keep fairseq time-major (S,B,Dv)
    if key_padding_mask is None:
        m2 = jnp.zeros((S, B), jnp.float32)
    else:
        m2 = key_padding_mask.astype(jnp.float32)

    if S_pad != S:
        v3 = jnp.pad(v3, ((0, S_pad - S), (0, 0), (0, 0)))
        m2 = jnp.pad(m2, ((0, S_pad - S), (0, 0)), constant_values=1.0)  # pad=masked
    if B_pad != B:
        q2 = jnp.pad(q2, ((0, B_pad - B), (0, 0)))
        v3 = jnp.pad(v3, ((0, 0), (0, B_pad - B), (0, 0)))
        m2 = jnp.pad(m2, ((0, 0), (0, B_pad - B)))   # zeros => unmasked => finite

    n_b = B_pad // TB
    n_s = S_pad // TS

    grid_spec = pltpu.PrefetchScalarGridSpec(
        num_scalar_prefetch=0,
        grid=(n_b, n_s),
        in_specs=[
            pl.BlockSpec((TB, Qd), lambda b, s: (b, 0)),          # query
            pl.BlockSpec((TS, TB, Dv), lambda b, s: (s, b, 0)),   # value (time-major)
            pl.BlockSpec((TS, TB), lambda b, s: (s, b)),          # padding mask
            pl.BlockSpec((Qd, E), lambda b, s: (0, 0)),           # Wq (bf16)
            pl.BlockSpec((Dv, E), lambda b, s: (0, 0)),           # Wv (bf16)
            pl.BlockSpec((1, E), lambda b, s: (0, 0)),            # normed_v
            pl.BlockSpec((1, E), lambda b, s: (0, 0)),            # b
        ],
        out_specs=[
            pl.BlockSpec((TB, Dv), lambda b, s: (b, 0)),          # context
            pl.BlockSpec((S_pad, TB), lambda b, s: (0, b)),       # attn in (S,B) layout
        ],
        scratch_shapes=[
            pltpu.VMEM((1, TB), jnp.float32),    # running max
            pltpu.VMEM((1, TB), jnp.float32),    # running sum
            pltpu.VMEM((TB, Dv), jnp.float32),   # context accumulator
        ],
    )

    ctx_p, attn_p = pl.pallas_call(
        _bahdanau_kernel,
        out_shape=(
            jax.ShapeDtypeStruct((B_pad, Dv), jnp.float32),
            jax.ShapeDtypeStruct((S_pad, B_pad), jnp.float32),
        ),
        grid_spec=grid_spec,
        compiler_params=pltpu.CompilerParams(
            dimension_semantics=("parallel", "arbitrary"),
            vmem_limit_bytes=48 * 1024 * 1024),   # fits v7x's 64 MiB physical VMEM
    )(q2, v3, m2, wq, wv, normed_v, bias)

    context = ctx_p[:B]                       # (B, Dv)
    attn_scores = attn_p[:S, :B]              # (S, B) -- no wrapper transpose
    next_state = attn_scores
    return context, attn_scores, next_state


def reference(query, value, key_padding_mask, params):
    """Pure-JAX mirror of BahdanauAttention.forward (normalize=True)."""
    wq, wv = params["wq"], params["wv"]
    vvec, bvec, g = params["v"][0], params["b"][0], params["g"][0, 0]
    pq = query @ wq                                              # (B, E)
    key = jnp.einsum("sbd,de->sbe", value, wv)                   # (S, B, E)
    normed_v = g * vvec / jnp.sqrt(jnp.sum(vvec * vvec))
    scores = jnp.sum(normed_v * jnp.tanh(pq[None] + key + bvec), axis=2)  # (S,B)
    if key_padding_mask is not None:
        scores = jnp.where(key_padding_mask, -jnp.inf, scores)
    attn = jax.nn.softmax(scores, axis=0)
    ctx = jnp.sum(attn[:, :, None] * value, axis=0)              # (B, Dv)
    return ctx, attn


if __name__ == "__main__":
    B, S = 3, 20
    Qd, Dv, E = 32, 32, 32

    root = jax.random.PRNGKey(0)
    kq, kv, kwq, kwv, kvv = jax.random.split(root, 5)

    query = jax.random.normal(kq, (B, Qd), jnp.float32)
    value = jax.random.normal(kv, (S, B, Dv), jnp.float32)
    # True = padded. Batch lengths S, 13, 7.
    lengths = jnp.array([S, 13, 7], dtype=jnp.int32)
    pos = jnp.arange(S)[:, None]                                   # (S, 1)
    key_padding_mask = pos >= lengths[None, :]                     # (S, B) bool

    params = {
        "wq": jax.random.normal(kwq, (Qd, E), jnp.float32) / math.sqrt(Qd),
        "wv": jax.random.normal(kwv, (Dv, E), jnp.float32) / math.sqrt(Dv),
        "v": jax.random.uniform(kvv, (1, E), jnp.float32,
                                -1.0 / math.sqrt(E), 1.0 / math.sqrt(E)),
        "b": jnp.zeros((1, E), jnp.float32),
        "g": jnp.full((1, 1), math.sqrt(1.0 / E), jnp.float32),
    }

    ctx_ref, attn_ref = reference(query, value, key_padding_mask, params)

    # Multi-source-tile path (exercises the online softmax across 3 S-tiles).
    ctx, attn, state = bahdanau_attention(query, value, key_padding_mask, params,
                                          s_tile=8)
    jax.block_until_ready((ctx, attn, state))
    assert ctx.shape == (B, Dv) and attn.shape == (S, B)
    # bf16 MXU inputs (f32 accumulation) + approx reciprocal => looser tolerance.
    assert jnp.allclose(ctx, ctx_ref, atol=2e-2, rtol=2e-2)
    assert jnp.allclose(attn, attn_ref, atol=2e-2, rtol=2e-2)
    assert jnp.allclose(state, attn_ref, atol=2e-2, rtol=2e-2)

    # Default (single source tile) path.
    ctx2, attn2, _ = bahdanau_attention(query, value, key_padding_mask, params)
    jax.block_until_ready((ctx2, attn2))
    assert jnp.allclose(ctx2, ctx_ref, atol=2e-2, rtol=2e-2)
    assert jnp.allclose(attn2, attn_ref, atol=2e-2, rtol=2e-2)

    print("KERNEL_OK")
</pallas_src>

<mosaic_0001>
module attributes {stable_mosaic.version = 11 : i64} {
  func.func @_bahdanau_kernel(%arg0: i32, %arg1: i32, %arg2: memref<8x32xf32, #tpu.memory_space<vmem>>, %arg3: memref<8x8x32xf32, #tpu.memory_space<vmem>>, %arg4: memref<8x8xf32, #tpu.memory_space<vmem>>, %arg5: memref<32x32xbf16, #tpu.memory_space<vmem>>, %arg6: memref<32x32xbf16, #tpu.memory_space<vmem>>, %arg7: memref<1x32xf32, #tpu.memory_space<vmem>>, %arg8: memref<1x32xf32, #tpu.memory_space<vmem>>, %arg9: memref<8x32xf32, #tpu.memory_space<vmem>>, %arg10: memref<24x8xf32, #tpu.memory_space<vmem>>, %arg11: memref<1x8xf32, #tpu.memory_space<vmem>>, %arg12: memref<1x8xf32, #tpu.memory_space<vmem>>, %arg13: memref<8x32xf32, #tpu.memory_space<vmem>>) attributes {dimension_semantics = [#tpu.dimension_semantics<parallel>, #tpu.dimension_semantics<arbitrary>], iteration_bounds = array<i64: 1, 3>, scalar_prefetch = 0 : i64, scratch_operands = 3 : i64, tpu.core_type = #tpu.core_type<tc>, window_params = [{transform_indices = @transform_0, window_bounds = array<i64: 8, 32>}, {transform_indices = @transform_1, window_bounds = array<i64: 8, 8, 32>}, {transform_indices = @transform_2, window_bounds = array<i64: 8, 8>}, {pipeline_mode = #tpu.pipeline_mode<synchronous>, transform_indices = @transform_3, window_bounds = array<i64: 32, 32>}, {pipeline_mode = #tpu.pipeline_mode<synchronous>, transform_indices = @transform_4, window_bounds = array<i64: 32, 32>}, {pipeline_mode = #tpu.pipeline_mode<synchronous>, transform_indices = @transform_5, window_bounds = array<i64: 1, 32>}, {pipeline_mode = #tpu.pipeline_mode<synchronous>, transform_indices = @transform_6, window_bounds = array<i64: 1, 32>}, {transform_indices = @transform_7, window_bounds = array<i64: 8, 32>}, {transform_indices = @transform_8, window_bounds = array<i64: 24, 8>}]} {
    %c0_i32 = arith.constant 0 : i32
    %0 = arith.cmpi eq, %arg1, %c0_i32 : i32
    %1 = arith.extui %0 : i1 to i32
    %c0_i32_0 = arith.constant 0 : i32
    %2 = arith.cmpi ne, %1, %c0_i32_0 : i32
    scf.if %2 {
      %cst_38 = arith.constant -1.000000e+30 : f32
      %72 = vector.broadcast %cst_38 : f32 to vector<1x8xf32>
      %c0_39 = arith.constant 0 : index
      %c0_40 = arith.constant 0 : index
      %73 = vector.load %arg11[%c0_39, %c0_40] : memref<1x8xf32, #tpu.memory_space<vmem>>, vector<1x8xf32>
      tpu.vector_store %arg11[%c0_39, %c0_40], %72 {strides = array<i32>} : memref<1x8xf32, #tpu.memory_space<vmem>>, vector<1x8xf32>,
      %cst_41 = arith.constant 0.000000e+00 : f32
      %74 = vector.broadcast %cst_41 : f32 to vector<1x8xf32>
      %c0_42 = arith.constant 0 : index
      %c0_43 = arith.constant 0 : index
      %75 = vector.load %arg12[%c0_42, %c0_43] : memref<1x8xf32, #tpu.memory_space<vmem>>, vector<1x8xf32>
      tpu.vector_store %arg12[%c0_42, %c0_43], %74 {strides = array<i32>} : memref<1x8xf32, #tpu.memory_space<vmem>>, vector<1x8xf32>,
      %cst_44 = arith.constant 0.000000e+00 : f32
      %76 = vector.broadcast %cst_44 : f32 to vector<8x32xf32>
      %c0_45 = arith.constant 0 : index
      %c0_46 = arith.constant 0 : index
      %77 = vector.load %arg13[%c0_45, %c0_46] : memref<8x32xf32, #tpu.memory_space<vmem>>, vector<8x32xf32>
      tpu.vector_store %arg13[%c0_45, %c0_46], %76 {strides = array<i32>} : memref<8x32xf32, #tpu.memory_space<vmem>>, vector<8x32xf32>,
    } else {
    }
    %c0 = arith.constant 0 : index
    %c0_1 = arith.constant 0 : index
    %3 = vector.load %arg2[%c0, %c0_1] : memref<8x32xf32, #tpu.memory_space<vmem>>, vector<8x32xf32>
    %4 = arith.truncf %3 : vector<8x32xf32> to vector<8x32xbf16>
    %c0_2 = arith.constant 0 : index
    %c0_3 = arith.constant 0 : index
    %5 = vector.load %arg5[%c0_2, %c0_3] : memref<32x32xbf16, #tpu.memory_space<vmem>>, vector<32x32xbf16>
    %cst = arith.constant dense<0.000000e+00> : vector<8x32xf32>
    %6 = tpu.matmul %4, %5, %cst {dimension_numbers = #tpu.dot_dimension_numbers<[1], [0], [0], [1], [0, 0, 1, 1], [], []>} : vector<8x32xbf16>, vector<32x32xbf16>, vector<8x32xf32> -> vector<8x32xf32>
    %c0_4 = arith.constant 0 : index
    %c0_5 = arith.constant 0 : index
    %c0_6 = arith.constant 0 : index
    %7 = vector.load %arg3[%c0_4, %c0_5, %c0_6] : memref<8x8x32xf32, #tpu.memory_space<vmem>>, vector<8x8x32xf32>
    %8 = arith.truncf %7 : vector<8x8x32xf32> to vector<8x8x32xbf16>
    %9 = vector.shape_cast %8 : vector<8x8x32xbf16> to vector<64x32xbf16>
    %c0_7 = arith.constant 0 : index
    %c0_8 = arith.constant 0 : index
    %10 = vector.load %arg6[%c0_7, %c0_8] : memref<32x32xbf16, #tpu.memory_space<vmem>>, vector<32x32xbf16>
    %cst_9 = arith.constant dense<0.000000e+00> : vector<64x32xf32>
    %11 = tpu.matmul %9, %10, %cst_9 {dimension_numbers = #tpu.dot_dimension_numbers<[1], [0], [0], [1], [0, 0, 1, 1], [], []>} : vector<64x32xbf16>, vector<32x32xbf16>, vector<64x32xf32> -> vector<64x32xf32>
    %12 = vector.shape_cast %11 : vector<64x32xf32> to vector<8x8x32xf32>
    %13 = vector.shape_cast %6 : vector<8x32xf32> to vector<1x8x32xf32>
    %14 = vector.broadcast %13 : vector<1x8x32xf32> to vector<8x8x32xf32>
    %15 = arith.addf %14, %12 : vector<8x8x32xf32>
    %c0_10 = arith.constant 0 : index
    %c0_11 = arith.constant 0 : index
    %16 = vector.load %arg8[%c0_10, %c0_11] : memref<1x32xf32, #tpu.memory_space<vmem>>, vector<1x32xf32>
    %17 = vector.shape_cast %16 : vector<1x32xf32> to vector<1x1x32xf32>
    %18 = vector.broadcast %17 : vector<1x1x32xf32> to vector<8x8x32xf32>
    %19 = arith.addf %15, %18 : vector<8x8x32xf32>
    %20 = math.tanh %19 : vector<8x8x32xf32>
    %c0_12 = arith.constant 0 : index
    %c0_13 = arith.constant 0 : index
    %21 = vector.load %arg7[%c0_12, %c0_13] : memref<1x32xf32, #tpu.memory_space<vmem>>, vector<1x32xf32>
    %22 = vector.shape_cast %21 : vector<1x32xf32> to vector<1x1x32xf32>
    %23 = vector.broadcast %22 : vector<1x1x32xf32> to vector<8x8x32xf32>
    %24 = arith.mulf %23, %20 : vector<8x8x32xf32>
    %cst_14 = arith.constant dense<0.000000e+00> : vector<8x8xf32>
    %25 = vector.multi_reduction <add>, %24, %cst_14 [2] : vector<8x8x32xf32> to vector<8x8xf32>
    %c0_15 = arith.constant 0 : index
    %c0_16 = arith.constant 0 : index
    %26 = vector.load %arg4[%c0_15, %c0_16] : memref<8x8xf32, #tpu.memory_space<vmem>>, vector<8x8xf32>
    %cst_17 = arith.constant 5.000000e-01 : f32
    %27 = vector.broadcast %cst_17 : f32 to vector<8x8xf32>
    %28 = arith.cmpf ogt, %26, %27 : vector<8x8xf32>
    %cst_18 = arith.constant -1.000000e+30 : f32
    %29 = vector.broadcast %cst_18 : f32 to vector<8x8xf32>
    %30 = arith.select %28, %29, %25 : vector<8x8xi1>, vector<8x8xf32>
    %c8_i32 = arith.constant 8 : i32
    %31 = arith.muli %arg1, %c8_i32 : i32
    %32 = tpu.assume_multiple %31, 8 : i32
    %33 = arith.index_cast %32 : i32 to index
    %c0_19 = arith.constant 0 : index
    %34 = vector.load %arg10[%33, %c0_19] : memref<24x8xf32, #tpu.memory_space<vmem>>, vector<8x8xf32>
    tpu.vector_store %arg10[%33, %c0_19], %30 {strides = array<i32>} : memref<24x8xf32, #tpu.memory_space<vmem>>, vector<8x8xf32>,
    %c0_20 = arith.constant 0 : index
    %c0_21 = arith.constant 0 : index
    %35 = vector.load %arg11[%c0_20, %c0_21] : memref<1x8xf32, #tpu.memory_space<vmem>>, vector<1x8xf32>
    %cst_22 = arith.constant dense<0xFF800000> : vector<8xf32>
    %36 = vector.multi_reduction <maximumf>, %30, %cst_22 [0] : vector<8x8xf32> to vector<8xf32>
    %37 = vector.shape_cast %36 : vector<8xf32> to vector<1x8xf32>
    %38 = arith.maximumf %35, %37 : vector<1x8xf32>
    %39 = arith.subf %35, %38 : vector<1x8xf32>
    %40 = math.exp %39 : vector<1x8xf32>
    %41 = vector.broadcast %38 : vector<1x8xf32> to vector<8x8xf32>
    %42 = arith.subf %30, %41 : vector<8x8xf32>
    %43 = math.exp %42 : vector<8x8xf32>
    %c0_23 = arith.constant 0 : index
    %c0_24 = arith.constant 0 : index
    %44 = vector.load %arg12[%c0_23, %c0_24] : memref<1x8xf32, #tpu.memory_space<vmem>>, vector<1x8xf32>
    %45 = arith.mulf %40, %44 : vector<1x8xf32>
    %cst_25 = arith.constant dense<0.000000e+00> : vector<8xf32>
    %46 = vector.multi_reduction <add>, %43, %cst_25 [0] : vector<8x8xf32> to vector<8xf32>
    %47 = vector.shape_cast %46 : vector<8xf32> to vector<1x8xf32>
    %48 = arith.addf %45, %47 : vector<1x8xf32>
    %c0_26 = arith.constant 0 : index
    %c0_27 = arith.constant 0 : index
    %49 = vector.load %arg12[%c0_26, %c0_27] : memref<1x8xf32, #tpu.memory_space<vmem>>, vector<1x8xf32>
    tpu.vector_store %arg12[%c0_26, %c0_27], %48 {strides = array<i32>} : memref<1x8xf32, #tpu.memory_space<vmem>>, vector<1x8xf32>,
    %c0_28 = arith.constant 0 : index
    %c0_29 = arith.constant 0 : index
    %50 = vector.load %arg11[%c0_28, %c0_29] : memref<1x8xf32, #tpu.memory_space<vmem>>, vector<1x8xf32>
    tpu.vector_store %arg11[%c0_28, %c0_29], %38 {strides = array<i32>} : memref<1x8xf32, #tpu.memory_space<vmem>>, vector<1x8xf32>,
    %51 = vector.shape_cast %43 : vector<8x8xf32> to vector<8x8x1xf32>
    %52 = vector.broadcast %51 : vector<8x8x1xf32> to vector<8x8x32xf32>
    %53 = arith.mulf %52, %7 : vector<8x8x32xf32>
    %cst_30 = arith.constant dense<0.000000e+00> : vector<8x32xf32>
    %54 = vector.multi_reduction <add>, %53, %cst_30 [0] : vector<8x8x32xf32> to vector<8x32xf32>
    %55 = tpu.iota {dimensions = array<i32: 0>} : vector<8x8xi32>
    %56 = tpu.iota {dimensions = array<i32: 1>} : vector<8x8xi32>
    %57 = arith.cmpi eq, %55, %56 : vector<8x8xi32>
    %cst_31 = arith.constant 0.000000e+00 : f32
    %58 = vector.shape_cast %40 : vector<1x8xf32> to vector<1x8xf32>
    %59 = vector.broadcast %58 : vector<1x8xf32> to vector<8x8xf32>
    %60 = vector.broadcast %cst_31 : f32 to vector<8x8xf32>
    %61 = arith.select %57, %59, %60 : vector<8x8xi1>, vector<8x8xf32>
    %cst_32 = arith.constant dense<0.000000e+00> : vector<8xf32>
    %62 = vector.multi_reduction <add>, %61, %cst_32 [1] : vector<8x8xf32> to vector<8xf32>
    %63 = vector.shape_cast %62 : vector<8xf32> to vector<8x1xf32>
    %c0_33 = arith.constant 0 : index
    %c0_34 = arith.constant 0 : index
    %64 = vector.load %arg13[%c0_33, %c0_34] : memref<8x32xf32, #tpu.memory_space<vmem>>, vector<8x32xf32>
    %65 = vector.broadcast %63 : vector<8x1xf32> to vector<8x32xf32>
    %66 = arith.mulf %65, %64 : vector<8x32xf32>
    %67 = arith.addf %66, %54 : vector<8x32xf32>
    %c0_35 = arith.constant 0 : index
    %c0_36 = arith.constant 0 : index
    %68 = vector.load %arg13[%c0_35, %c0_36] : memref<8x32xf32, #tpu.memory_space<vmem>>, vector<8x32xf32>
    tpu.vector_store %arg13[%c0_35, %c0_36], %67 {strides = array<i32>} : memref<8x32xf32, #tpu.memory_space<vmem>>, vector<8x32xf32>,
    %c2_i32 = arith.constant 2 : i32
    %69 = arith.cmpi eq, %arg1, %c2_i32 : i32
    %70 = arith.extui %69 : i1 to i32
    %c0_i32_37 = arith.constant 0 : i32
    %71 = arith.cmpi ne, %70, %c0_i32_37 : i32
    scf.if %71 {
      %c0_38 = arith.constant 0 : index
      %c0_39 = arith.constant 0 : index
      %72 = vector.load %arg12[%c0_38, %c0_39] : memref<1x8xf32, #tpu.memory_space<vmem>>, vector<1x8xf32>
      %73 = tpu.reciprocal %72 {approx = true} : vector<1x8xf32> -> vector<1x8xf32>
      %c0_40 = arith.constant 0 : index
      %c0_41 = arith.constant 0 : index
      %74 = vector.load %arg10[%c0_40, %c0_41] : memref<24x8xf32, #tpu.memory_space<vmem>>, vector<24x8xf32>
      %c0_42 = arith.constant 0 : index
      %c0_43 = arith.constant 0 : index
      %75 = vector.load %arg11[%c0_42, %c0_43] : memref<1x8xf32, #tpu.memory_space<vmem>>, vector<1x8xf32>
      %76 = vector.broadcast %75 : vector<1x8xf32> to vector<24x8xf32>
      %77 = arith.subf %74, %76 : vector<24x8xf32>
      %78 = math.exp %77 : vector<24x8xf32>
      %79 = vector.broadcast %73 : vector<1x8xf32> to vector<24x8xf32>
      %80 = arith.mulf %78, %79 : vector<24x8xf32>
      %c0_44 = arith.constant 0 : index
      %c0_45 = arith.constant 0 : index
      %81 = vector.load %arg10[%c0_44, %c0_45] : memref<24x8xf32, #tpu.memory_space<vmem>>, vector<24x8xf32>
      tpu.vector_store %arg10[%c0_44, %c0_45], %80 {strides = array<i32>} : memref<24x8xf32, #tpu.memory_space<vmem>>, vector<24x8xf32>,
      %c0_46 = arith.constant 0 : index
      %c0_47 = arith.constant 0 : index
      %82 = vector.load %arg13[%c0_46, %c0_47] : memref<8x32xf32, #tpu.memory_space<vmem>>, vector<8x32xf32>
      %83 = tpu.iota {dimensions = array<i32: 0>} : vector<8x8xi32>
      %84 = tpu.iota {dimensions = array<i32: 1>} : vector<8x8xi32>
      %85 = arith.cmpi eq, %83, %84 : vector<8x8xi32>
      %cst_48 = arith.constant 0.000000e+00 : f32
      %86 = vector.shape_cast %73 : vector<1x8xf32> to vector<1x8xf32>
      %87 = vector.broadcast %86 : vector<1x8xf32> to vector<8x8xf32>
      %88 = vector.broadcast %cst_48 : f32 to vector<8x8xf32>
      %89 = arith.select %85, %87, %88 : vector<8x8xi1>, vector<8x8xf32>
      %cst_49 = arith.constant dense<0.000000e+00> : vector<8xf32>
      %90 = vector.multi_reduction <add>, %89, %cst_49 [1] : vector<8x8xf32> to vector<8xf32>
      %91 = vector.shape_cast %90 : vector<8xf32> to vector<8x1xf32>
      %92 = vector.broadcast %91 : vector<8x1xf32> to vector<8x32xf32>
      %93 = arith.mulf %82, %92 : vector<8x32xf32>
      %c0_50 = arith.constant 0 : index
      %c0_51 = arith.constant 0 : index
      %94 = vector.load %arg9[%c0_50, %c0_51] : memref<8x32xf32, #tpu.memory_space<vmem>>, vector<8x32xf32>
      tpu.vector_store %arg9[%c0_50, %c0_51], %93 {strides = array<i32>} : memref<8x32xf32, #tpu.memory_space<vmem>>, vector<8x32xf32>,
    } else {
    }
    return
  }
  func.func @transform_0(%arg0: i32, %arg1: i32) -> (i32, i32) {
    %c0_i32 = arith.constant 0 : i32
    %c0_i32_0 = arith.constant 0 : i32
    return %arg0, %c0_i32 : i32, i32
  }
  func.func @transform_1(%arg0: i32, %arg1: i32) -> (i32, i32, i32) {
    %c0_i32 = arith.constant 0 : i32
    %c0_i32_0 = arith.constant 0 : i32
    return %arg1, %arg0, %c0_i32 : i32, i32, i32
  }
  func.func @transform_2(%arg0: i32, %arg1: i32) -> (i32, i32) {
    %c0_i32 = arith.constant 0 : i32
    return %arg1, %arg0 : i32, i32
  }
  func.func @transform_3(%arg0: i32, %arg1: i32) -> (i32, i32) {
    %c0_i32 = arith.constant 0 : i32
    %c0_i32_0 = arith.constant 0 : i32
    %c0_i32_1 = arith.constant 0 : i32
    return %c0_i32, %c0_i32_0 : i32, i32
  }
  func.func @transform_4(%arg0: i32, %arg1: i32) -> (i32, i32) {
    %c0_i32 = arith.constant 0 : i32
    %c0_i32_0 = arith.constant 0 : i32
    %c0_i32_1 = arith.constant 0 : i32
    return %c0_i32, %c0_i32_0 : i32, i32
  }
  func.func @transform_5(%arg0: i32, %arg1: i32) -> (i32, i32) {
    %c0_i32 = arith.constant 0 : i32
    %c0_i32_0 = arith.constant 0 : i32
    %c0_i32_1 = arith.constant 0 : i32
    return %c0_i32, %c0_i32_0 : i32, i32
  }
  func.func @transform_6(%arg0: i32, %arg1: i32) -> (i32, i32) {
    %c0_i32 = arith.constant 0 : i32
    %c0_i32_0 = arith.constant 0 : i32
    %c0_i32_1 = arith.constant 0 : i32
    return %c0_i32, %c0_i32_0 : i32, i32
  }
  func.func @transform_7(%arg0: i32, %arg1: i32) -> (i32, i32) {
    %c0_i32 = arith.constant 0 : i32
    %c0_i32_0 = arith.constant 0 : i32
    return %arg0, %c0_i32 : i32, i32
  }
  func.func @transform_8(%arg0: i32, %arg1: i32) -> (i32, i32) {
    %c0_i32 = arith.constant 0 : i32
    %c0_i32_0 = arith.constant 0 : i32
    return %c0_i32, %arg0 : i32, i32
  }
}

</mosaic_0001>

<llo_original>
// kernel: tpu_custom_call.1
$region0: #{tpu_custom_call.1}
  #allocation0 [shape = 'u32[]', space=smem, size = 0x4, offset = 0x4, fixed_abs, tag = 'smem constant byte address 0x4 - core index']
  #allocation1 [shape = 'u32[144,128]{1,0:T(1,128)}', space=vmem, size = 0x12000, scoped, tag = 'internal scratch']
  #allocation2 [shape = 'f32[1,8]{1,0:T(1,128)}', space=vmem, size = 0x200, scoped, tag = 'scratch operand']
  #allocation3 [shape = 'f32[1,8]{1,0:T(1,128)}', space=vmem, size = 0x200, scoped, tag = 'scratch operand']
  #allocation4 [shape = 'f32[8,32]{1,0:T(8,128)}', space=vmem, size = 0x1000, scoped, tag = 'scratch operand']
  %s0 = inlined_call_operand.hbm [shape: f32[8,32], index: 0, kind: input, shape index: {}]
  %s1 = inlined_call_operand.hbm [shape: f32[24,8,32], index: 1, kind: input, shape index: {}]
  %s2 = inlined_call_operand.vmem [shape: f32[24,8], index: 2, kind: input, shape index: {}]
  %s3 = inlined_call_operand.vmem [shape: bf16[32,32], index: 3, kind: input, shape index: {}]
  %s4 = inlined_call_operand.vmem [shape: bf16[32,32], index: 4, kind: input, shape index: {}]
  %s5 = inlined_call_operand.vmem [shape: f32[1,32], index: 5, kind: input, shape index: {}]
  %s6 = inlined_call_operand.vmem [shape: f32[1,32], index: 6, kind: input, shape index: {}]
  %s7 = inlined_call_operand.hbm [shape: f32[8,32], index: 7, kind: output, shape index: {0}]
  %s8 = inlined_call_operand.vmem [shape: f32[24,8], index: 8, kind: output, shape index: {1}]
  %9 = xla_tuple %s7, %s8
  %s10 = sld [smem:[#allocation0]]
  $region85: #{tpu_custom_call.1} parent=0
    _
  %s12 = ssub.s32 1, %s10
  %s13 = scalar_select 0, %s12, %s10
  $region1: #{tpu_custom_call.1} parent=0
    #allocation5 [shape = 'u8[4096]{0}', space=vmem, size = 0x1000, scoped, tag = 'input window, operand 0, single buffered']
    #allocation6 [shape = 's32[2]{0}', space=sflag, size = 0x8, scoped, tag = 'scoped memory for tpu_custom_call.1']
    #allocation7 [shape = 's32[2]{0}', space=sflag, size = 0x8, scoped, tag = 'scoped memory for tpu_custom_call.1']
    #allocation8 [shape = 'u8[65536]{0}', space=vmem, size = 0x10000, scoped, tag = 'input window, operand 1']
    #allocation9 [shape = 's32[2]{0}', space=sflag, size = 0x8, scoped, tag = 'scoped memory for tpu_custom_call.1']
    #allocation10 [shape = 'u8[4096]{0}', space=vmem, size = 0x1000, scoped, tag = 'output window, operand 0, single buffered']
    %14 = vsyncpa [#allocation6], 0
    %15 = vsyncpa [#allocation9], 0
    %s16 = scalar_lea.sflag [#allocation9], 1
    %17 = vsyncpa %s16, 0
    %18 = vsyncpa [#allocation7], 0
    loop: start=0, step=1, limit=5
    $region2: #{tpu_custom_call.1} parent=1 // loop_pre_header
      _
    $region3: #{tpu_custom_call.1} parent=1 // loop_header
      %s20 = sphi 0, %s24
      %p21 = scmp.ge.s32.totalorder %s20, 5
      %s27 = sphi 0, %s39
      %s28 = sphi 0, %s35
      %s29 = sphi 0, %s27
      %s30 = sphi 0, %s28
      %s31 = sphi 0, %s29
      %s32 = sphi 0, %s30
      %s42 = sphi 0, %s44
      %s45 = sphi 0, %s42
      %s46 = sphi 0, %s45
      %s62 = sphi 0, %s46
      %s70 = sphi 0, %s72
      %s73 = sphi 0, %s70
      %s74 = sphi 0, %s73
      %s90 = sphi 0, %s74
      %s98 = sphi 0, %s100
      %s101 = sphi 0, %s98
      %s102 = sphi 0, %s101
      %s118 = sphi 0, %s102
      %s122 = sphi 0, %s122
      %s124 = sphi 0, %s122
      %s125 = sphi 0, %s124
      %s139 = sphi 0, %s125
      %s143 = sphi 0, %s143
      %s145 = sphi 0, %s143
      %s146 = sphi 0, %s145
      %s160 = sphi 0, %s146
      %s164 = sphi 0, %s164
      %s166 = sphi 0, %s164
      %s167 = sphi 0, %s166
      %s181 = sphi 0, %s167
      %s185 = sphi 0, %s185
      %s187 = sphi 0, %s185
      %s188 = sphi 0, %s187
      %s202 = sphi 0, %s188
      %s208 = sphi 0, %s210
      %s211 = sphi 0, %s208
      %s212 = sphi 0, %s211
      %s228 = sphi 0, %s212
      %s234 = sphi 0, %s236
      %s237 = sphi 0, %s234
      %s238 = sphi 0, %s237
      %s254 = sphi 0, %s238
    $region4: #{tpu_custom_call.1} parent=1 // loop_header_branch
      %23 = sbr.rel (%p21) target = $region8
    $region5: #{tpu_custom_call.1} parent=1 // loop_body
      %s25 = ssub.s32 %s20, 1
      %s26 = ssub.s32 %s20, 2
      %s33 = sadd.s32 1, %s28
      %p34 = scmp.ge.s32.totalorder %s33, 3
      %s35 = scalar_select %p34, 0, %s33
      %s36 = sadd.s32 1, %s27
      %s37 = scalar_select %p34, %s36, %s27
      %p38 = scmp.ge.s32.totalorder %s37, 1
      %s39 = scalar_select %p38, 0, %s37
      %s40 = ssub.s32 %s27, %s39
      %p41 = scmp.eq.s32.totalorder %s40, 0
      %s43 = sadd.s32 %s42, 1
      %s44 = scalar_select %p41, %s42, %s43
      %p47 = pneg %p41
      %p48 = scmp.eq.s32.totalorder %s20, 2
      %p49 = por %p47, %p48
      %p50 = scmp.ne.s32.totalorder %s42, %s45
      %p51 = scmp.eq.s32.totalorder %s20, 0
      %p52 = por %p50, %p51
      %p53 = scmp.ne.s32.totalorder %s42, %s45
      %p54 = scmp.eq.s32.totalorder %s25, 2
      %p55 = por %p53, %p54
      %p56 = scmp.ne.s32.totalorder %s45, %s46
      %p57 = scmp.eq.s32.totalorder %s25, 0
      %p58 = por %p56, %p57
      %p59 = scmp.ne.s32.totalorder %s45, %s46
      %p60 = scmp.eq.s32.totalorder %s26, 2
      %p61 = por %p59, %p60
      %p63 = scmp.ne.s32.totalorder %s46, %s62
      %p64 = scmp.eq.s32.totalorder %s26, 0
      %p65 = por %p63, %p64
      %s66 = ssub.s32 %s28, %s35
      %s67 = ssub.s32 %s27, %s39
      %s68 = sor.u32 %s66, %s67
      %p69 = scmp.eq.s32.totalorder %s68, 0
      %s71 = sadd.s32 %s70, 1
      %s72 = scalar_select %p69, %s70, %s71
      %p75 = pneg %p69
      %p76 = scmp.eq.s32.totalorder %s20, 2
      %p77 = por %p75, %p76
      %p78 = scmp.ne.s32.totalorder %s70, %s73
      %p79 = scmp.eq.s32.totalorder %s20, 0
      %p80 = por %p78, %p79
      %p81 = scmp.ne.s32.totalorder %s70, %s73
      %p82 = scmp.eq.s32.totalorder %s25, 2
      %p83 = por %p81, %p82
      %p84 = scmp.ne.s32.totalorder %s73, %s74
      %p85 = scmp.eq.s32.totalorder %s25, 0
      %p86 = por %p84, %p85
      %p87 = scmp.ne.s32.totalorder %s73, %s74
      %p88 = scmp.eq.s32.totalorder %s26, 2
      %p89 = por %p87, %p88
      %p91 = scmp.ne.s32.totalorder %s74, %s90
      %p92 = scmp.eq.s32.totalorder %s26, 0
      %p93 = por %p91, %p92
      %s94 = ssub.s32 %s28, %s35
      %s95 = ssub.s32 %s27, %s39
      %s96 = sor.u32 %s94, %s95
      %p97 = scmp.eq.s32.totalorder %s96, 0
      %s99 = sadd.s32 %s98, 1
      %s100 = scalar_select %p97, %s98, %s99
      %p103 = pneg %p97
      %p104 = scmp.eq.s32.totalorder %s20, 2
      %p105 = por %p103, %p104
      %p106 = scmp.ne.s32.totalorder %s98, %s101
      %p107 = scmp.eq.s32.totalorder %s20, 0
      %p108 = por %p106, %p107
      %p109 = scmp.ne.s32.totalorder %s98, %s101
      %p110 = scmp.eq.s32.totalorder %s25, 2
      %p111 = por %p109, %p110
      %p112 = scmp.ne.s32.totalorder %s101, %s102
      %p113 = scmp.eq.s32.totalorder %s25, 0
      %p114 = por %p112, %p113
      %p115 = scmp.ne.s32.totalorder %s101, %s102
      %p116 = scmp.eq.s32.totalorder %s26, 2
      %p117 = por %p115, %p116
      %p119 = scmp.ne.s32.totalorder %s102, %s118
      %p120 = scmp.eq.s32.totalorder %s26, 0
      %p121 = por %p119, %p120
      %s123 = sadd.s32 %s122, 1
      %p126 = scmp.eq.s32.totalorder %s20, 2
      %p127 = scmp.ne.s32.totalorder %s122, %s124
      %p128 = scmp.eq.s32.totalorder %s20, 0
      %p129 = por %p127, %p128
      %p130 = scmp.ne.s32.totalorder %s122, %s124
      %p131 = scmp.eq.s32.totalorder %s25, 2
      %p132 = por %p130, %p131
      %p133 = scmp.ne.s32.totalorder %s124, %s125
      %p134 = scmp.eq.s32.totalorder %s25, 0
      %p135 = por %p133, %p134
      %p136 = scmp.ne.s32.totalorder %s124, %s125
      %p137 = scmp.eq.s32.totalorder %s26, 2
      %p138 = por %p136, %p137
      %p140 = scmp.ne.s32.totalorder %s125, %s139
      %p141 = scmp.eq.s32.totalorder %s26, 0
      %p142 = por %p140, %p141
      %s144 = sadd.s32 %s143, 1
      %p147 = scmp.eq.s32.totalorder %s20, 2
      %p148 = scmp.ne.s32.totalorder %s143, %s145
      %p149 = scmp.eq.s32.totalorder %s20, 0
      %p150 = por %p148, %p149
      %p151 = scmp.ne.s32.totalorder %s143, %s145
      %p152 = scmp.eq.s32.totalorder %s25, 2
      %p153 = por %p151, %p152
      %p154 = scmp.ne.s32.totalorder %s145, %s146
      %p155 = scmp.eq.s32.totalorder %s25, 0
      %p156 = por %p154, %p155
      %p157 = scmp.ne.s32.totalorder %s145, %s146
      %p158 = scmp.eq.s32.totalorder %s26, 2
      %p159 = por %p157, %p158
      %p161 = scmp.ne.s32.totalorder %s146, %s160
      %p162 = scmp.eq.s32.totalorder %s26, 0
      %p163 = por %p161, %p162
      %s165 = sadd.s32 %s164, 1
      %p168 = scmp.eq.s32.totalorder %s20, 2
      %p169 = scmp.ne.s32.totalorder %s164, %s166
      %p170 = scmp.eq.s32.totalorder %s20, 0
      %p171 = por %p169, %p170
      %p172 = scmp.ne.s32.totalorder %s164, %s166
      %p173 = scmp.eq.s32.totalorder %s25, 2
      %p174 = por %p172, %p173
      %p175 = scmp.ne.s32.totalorder %s166, %s167
      %p176 = scmp.eq.s32.totalorder %s25, 0
      %p177 = por %p175, %p176
      %p178 = scmp.ne.s32.totalorder %s166, %s167
      %p179 = scmp.eq.s32.totalorder %s26, 2
      %p180 = por %p178, %p179
      %p182 = scmp.ne.s32.totalorder %s167, %s181
      %p183 = scmp.eq.s32.totalorder %s26, 0
      %p184 = por %p182, %p183
      %s186 = sadd.s32 %s185, 1
      %p189 = scmp.eq.s32.totalorder %s20, 2
      %p190 = scmp.ne.s32.totalorder %s185, %s187
      %p191 = scmp.eq.s32.totalorder %s20, 0
      %p192 = por %p190, %p191
      %p193 = scmp.ne.s32.totalorder %s185, %s187
      %p194 = scmp.eq.s32.totalorder %s25, 2
      %p195 = por %p193, %p194
      %p196 = scmp.ne.s32.totalorder %s187, %s188
      %p197 = scmp.eq.s32.totalorder %s25, 0
      %p198 = por %p196, %p197
      %p199 = scmp.ne.s32.totalorder %s187, %s188
      %p200 = scmp.eq.s32.totalorder %s26, 2
      %p201 = por %p199, %p200
      %p203 = scmp.ne.s32.totalorder %s188, %s202
      %p204 = scmp.eq.s32.totalorder %s26, 0
      %p205 = por %p203, %p204
      %s206 = ssub.s32 %s27, %s39
      %p207 = scmp.eq.s32.totalorder %s206, 0
      %s209 = sadd.s32 %s208, 1
      %s210 = scalar_select %p207, %s208, %s209
      %p213 = pneg %p207
      %p214 = scmp.eq.s32.totalorder %s20, 2
      %p215 = por %p213, %p214
      %p216 = scmp.ne.s32.totalorder %s208, %s211
      %p217 = scmp.eq.s32.totalorder %s20, 0
      %p218 = por %p216, %p217
      %p219 = scmp.ne.s32.totalorder %s208, %s211
      %p220 = scmp.eq.s32.totalorder %s25, 2
      %p221 = por %p219, %p220
      %p222 = scmp.ne.s32.totalorder %s211, %s212
      %p223 = scmp.eq.s32.totalorder %s25, 0
      %p224 = por %p222, %p223
      %p225 = scmp.ne.s32.totalorder %s211, %s212
      %p226 = scmp.eq.s32.totalorder %s26, 2
      %p227 = por %p225, %p226
      %p229 = scmp.ne.s32.totalorder %s212, %s228
      %p230 = scmp.eq.s32.totalorder %s26, 0
      %p231 = por %p229, %p230
      %s232 = ssub.s32 %s27, %s39
      %p233 = scmp.eq.s32.totalorder %s232, 0
      %s235 = sadd.s32 %s234, 1
      %s236 = scalar_select %p233, %s234, %s235
      %p239 = pneg %p233
      %p240 = scmp.eq.s32.totalorder %s20, 2
      %p241 = por %p239, %p240
      %p242 = scmp.ne.s32.totalorder %s234, %s237
      %p243 = scmp.eq.s32.totalorder %s20, 0
      %p244 = por %p242, %p243
      %p245 = scmp.ne.s32.totalorder %s234, %s237
      %p246 = scmp.eq.s32.totalorder %s25, 2
      %p247 = por %p245, %p246
      %p248 = scmp.ne.s32.totalorder %s237, %s238
      %p249 = scmp.eq.s32.totalorder %s25, 0
      %p250 = por %p248, %p249
      %p251 = scmp.ne.s32.totalorder %s237, %s238
      %p252 = scmp.eq.s32.totalorder %s26, 2
      %p253 = por %p251, %p252
      %p255 = scmp.ne.s32.totalorder %s238, %s254
      %p256 = scmp.eq.s32.totalorder %s26, 0
      %p257 = por %p255, %p256
      %p258 = scmp.le.s32.totalorder 1, %s20
      %p259 = scmp.lt.s32.totalorder %s20, 4
      %p260 = pnand %p258, %p259
      %p261 = pneg %p260
      // Predicated region
      $region9: #{tpu_custom_call.1} parent=5 // pred_check
        _
      $region10: #{tpu_custom_call.1} parent=5 // pred_check_branch
        %263 = sbr.rel (%p260) target = $region12
      $region11: #{tpu_custom_call.1} parent=5 // pred_region
        %s264 = ssub.s32 %s20, 1
        // Predicated region
        $region13: #{tpu_custom_call.1} parent=11 // pred_check
          %p265 = pneg %p58
        $region14: #{tpu_custom_call.1} parent=11 // pred_check_branch
          %267 = sbr.rel (%p265) target = $region16
        $region15: #{tpu_custom_call.1} parent=11 // pred_region
          %s269 = ssub.s32 128, 128
          %270 = vsyncadd [#allocation6], %s269
          %s271 = smul.addr %s29, 128
          %s272 = scalar_lea.hbm %s0, %s271
          %s274 = sshll.u32 [#allocation5], 4
          %s275 = int_to_ptr.vmem [resolvable:$true] %s274
          %277 = dma.hbm_to_vmem [thread:$0]  %s272, 128, %s275, [#allocation6]
        $region16: #{tpu_custom_call.1} parent=11 // pred_fallthru
          _
        // Predicated region
        $region17: #{tpu_custom_call.1} parent=11 // pred_check
          %p278 = pneg %p135
        $region18: #{tpu_custom_call.1} parent=11 // pred_check_branch
          %280 = sbr.rel (%p278) target = $region20
        $region19: #{tpu_custom_call.1} parent=11 // pred_region
          _
        $region20: #{tpu_custom_call.1} parent=11 // pred_fallthru
          _
        // Predicated region
        $region21: #{tpu_custom_call.1} parent=11 // pred_check
          %p281 = pneg %p156
        $region22: #{tpu_custom_call.1} parent=11 // pred_check_branch
          %283 = sbr.rel (%p281) target = $region24
        $region23: #{tpu_custom_call.1} parent=11 // pred_region
          _
        $region24: #{tpu_custom_call.1} parent=11 // pred_fallthru
          _
        // Predicated region
        $region25: #{tpu_custom_call.1} parent=11 // pred_check
          %p284 = pneg %p177
        $region26: #{tpu_custom_call.1} parent=11 // pred_check_branch
          %286 = sbr.rel (%p284) target = $region28
        $region27: #{tpu_custom_call.1} parent=11 // pred_region
          _
        $region28: #{tpu_custom_call.1} parent=11 // pred_fallthru
          _
        // Predicated region
        $region29: #{tpu_custom_call.1} parent=11 // pred_check
          %p287 = pneg %p198
        $region30: #{tpu_custom_call.1} parent=11 // pred_check_branch
          %289 = sbr.rel (%p287) target = $region32
        $region31: #{tpu_custom_call.1} parent=11 // pred_region
          _
        $region32: #{tpu_custom_call.1} parent=11 // pred_fallthru
          _
      $region12: #{tpu_custom_call.1} parent=5 // pred_fallthru
        _
      %p290 = scmp.lt.s32.totalorder %s20, 3
      // Predicated region
      $region33: #{tpu_custom_call.1} parent=5 // pred_check
        %p291 = pneg %p290
      $region34: #{tpu_custom_call.1} parent=5 // pred_check_branch
        %293 = sbr.rel (%p291) target = $region36
      $region35: #{tpu_custom_call.1} parent=5 // pred_region
        // Predicated region
        $region37: #{tpu_custom_call.1} parent=35 // pred_check
          %p294 = pneg %p80
        $region38: #{tpu_custom_call.1} parent=35 // pred_check_branch
          %296 = sbr.rel (%p294) target = $region40
        $region39: #{tpu_custom_call.1} parent=35 // pred_region
          %s297 = sand.u32 %s70, 1
          %s298 = scalar_lea.sflag [#allocation9], %s297
          %s299 = sand.u32 %s70, 1
          %s300 = smul.addr %s299, 64
          %s301 = scalar_lea.vmem [#allocation8], %s300
          %s302 = smul.u32 8, %s28
          %s304 = ssub.s32 1024, 1024
          %305 = vsyncadd %s298, %s304
          %s306 = sadd.s32 %s27, %s302
          %s307 = smul.addr %s306, 128
          %s308 = scalar_lea.hbm %s1, %s307
          %s309 = sshll.u32 %s301, 4
          %s310 = int_to_ptr.vmem [resolvable:$true] %s309
          %315 = dma.hbm_to_vmem [thread:$0]  %s308, 1024, %s310, %s298, 128, 128, 8
        $region40: #{tpu_custom_call.1} parent=35 // pred_fallthru
          _
        // Predicated region
        $region41: #{tpu_custom_call.1} parent=35 // pred_check
          %p316 = pneg %p108
        $region42: #{tpu_custom_call.1} parent=35 // pred_check_branch
          %318 = sbr.rel (%p316) target = $region44
        $region43: #{tpu_custom_call.1} parent=35 // pred_region
          %p319 = scmp.lt.s32.totalorder %s28, 2
          %s320 = scalar_select %p319, %s28, 2
          %p321 = scmp.lt.s32.totalorder %s27, 0
          %s322 = scalar_select %p321, %s27, 0
          %s323 = sadd.s32 %s322, %s320
          %s324 = smul.addr %s323, 8
          %s325 = scalar_lea.vmem %s2, %s324
        $region44: #{tpu_custom_call.1} parent=35 // pred_fallthru
          _
      $region36: #{tpu_custom_call.1} parent=5 // pred_fallthru
        _
      %p326 = scmp.le.s32.totalorder 1, %s20
      %p327 = scmp.lt.s32.totalorder %s20, 4
      %p328 = pnand %p326, %p327
      %p329 = pneg %p328
      // Predicated region
      $region45: #{tpu_custom_call.1} parent=5 // pred_check
        _
      $region46: #{tpu_custom_call.1} parent=5 // pred_check_branch
        %331 = sbr.rel (%p328) target = $region48
      $region47: #{tpu_custom_call.1} parent=5 // pred_region
        %s332 = ssub.s32 %s20, 1
        // Predicated region
        $region49: #{tpu_custom_call.1} parent=47 // pred_check
          %p333 = pneg %p58
        $region50: #{tpu_custom_call.1} parent=47 // pred_check_branch
          %335 = sbr.rel (%p333) target = $region52
        $region51: #{tpu_custom_call.1} parent=47 // pred_region
          %336 = dma.done [#allocation6], 128
        $region52: #{tpu_custom_call.1} parent=47 // pred_fallthru
          _
        %s337 = sand.u32 %s73, 1
        %s338 = scalar_lea.sflag [#allocation9], %s337
        %s339 = sand.u32 %s73, 1
        %s340 = smul.addr %s339, 64
        %s341 = scalar_lea.vmem [#allocation8], %s340
        // Predicated region
        $region53: #{tpu_custom_call.1} parent=47 // pred_check
          %p342 = pneg %p86
        $region54: #{tpu_custom_call.1} parent=47 // pred_check_branch
          %344 = sbr.rel (%p342) target = $region56
        $region55: #{tpu_custom_call.1} parent=47 // pred_region
          %345 = dma.done %s338, 1024
        $region56: #{tpu_custom_call.1} parent=47 // pred_fallthru
          _
        %p346 = pneg %p58
        %p347 = pneg %p55
        %s348 = sand.u32 %s73, 1
        %s349 = scalar_lea.sflag [#allocation9], %s348
        %s350 = sand.u32 %s73, 1
        %s351 = smul.addr %s350, 64
        %s352 = scalar_lea.vmem [#allocation8], %s351
        %p353 = pneg %p86
        %p354 = pneg %p83
        %p355 = scmp.lt.s32.totalorder %s30, 2
        %s356 = scalar_select %p355, %s30, 2
        %p357 = scmp.lt.s32.totalorder %s29, 0
        %s358 = scalar_select %p357, %s29, 0
        %s359 = sadd.s32 %s358, %s356
        %s360 = smul.addr %s359, 8
        %s361 = scalar_lea.vmem %s2, %s360
        %p362 = pneg %p114
        %p363 = pneg %p111
        %p364 = pneg %p135
        %p365 = pneg %p132
        %p366 = pneg %p156
        %p367 = pneg %p153
        %p368 = pneg %p177
        %p369 = pneg %p174
        %p370 = pneg %p198
        %p371 = pneg %p195
        %p372 = pneg %p224
        %p373 = pneg %p221
        %p374 = pneg %p250
        %p375 = pneg %p247
        %p376 = scmp.lt.s32.totalorder %s29, 0
        %s377 = scalar_select %p376, %s29, 0
        %s378 = smul.addr %s377, 8
        %s379 = scalar_lea.vmem %s8, %s378
        %s380 = smul.u32 8, %s30
        %p381 = scmp.lt.s32.totalorder %s30, 2
        %s382 = scalar_select %p381, %s30, 2
        %p383 = scmp.lt.s32.totalorder %s29, 0
        %s384 = scalar_select %p383, %s29, 0
        %s385 = sadd.s32 %s384, %s382
        %s386 = smul.addr %s385, 8
        %s387 = scalar_lea.vmem %s2, %s386
        %p388 = scmp.lt.s32.totalorder %s29, 0
        %s389 = scalar_select %p388, %s29, 0
        %s390 = smul.addr %s389, 8
        %s391 = scalar_lea.vmem %s8, %s390
        %p393 = scmp.eq.s32.totalorder %s30, 0
        // Predicated region
        $region57: #{tpu_custom_call.1} parent=47 // pred_check
          %p394 = pneg %p393
        $region58: #{tpu_custom_call.1} parent=47 // pred_check_branch
          %396 = sbr.rel (%p394) target = $region60
        $region59: #{tpu_custom_call.1} parent=47 // pred_region
          %vm397 = vcmask 57344
          %398 = vst.msk [vmem:[#allocation2] sm:$0x1] %vm397, -1e+30
          %399 = vst.msk [vmem:[#allocation3] sm:$0x1] %vm397, 0.0
          %vm400 = vcmask 261120
          %401 = vst.msk [vmem:[#allocation4] sm:$0xff] %vm400, 0.0
        $region60: #{tpu_custom_call.1} parent=47 // pred_fallthru
          _
        %v402 = vld [vmem:[#allocation5] sm:$0xff]
        %v403 = vpack.c.bf16 %v402, %v402
        %v404 = vld [vmem:[%s3] sm:$0xf]
        %v405 = vld [vmem:[%s3 + $0x4] sm:$0xf]
        %v406 = vld [vmem:[%s3 + $0x8] sm:$0xf]
        %v407 = vld [vmem:[%s3 + $0xc] sm:$0xf]
        %v412 = vunpack.c.l.b16 %v404
        %v413 = vunpack.c.l.b16 %v405
        %v414 = vunpack.c.l.b16 %v406
        %v415 = vunpack.c.l.b16 %v407
        %v416 = vpack.c.b16 %v413, %v412
        %v417 = vpack.c.b16 %v415, %v414
        %vm420 = vcmask 261120
        %v422 = vsel %vm420, %v403, 0
        %424 = vmatprep.subr.bf16.mxu0 0
        %425 = vmatpush1.bf16.msra.mxu0 0
        %426 = vmatprep.subr.bf16.mxu0 0
        %427 = vmatpush1.bf16.msra.mxu0 0
        %428 = vmatprep.subr.bf16.mxu0 0
        %429 = vmatpush1.bf16.msra.mxu0 0
        %430 = vmatprep.subr.bf16.mxu0 0
        %431 = vmatpush1.bf16.msra.mxu0 0
        %432 = vmatprep.subr.bf16.mxu0 0
        %433 = vmatpush1.bf16.msra.mxu0 0
        %434 = vmatprep.subr.bf16.mxu0 0
        %435 = vmatpush1.bf16.msra.mxu0 0
        %436 = vmatprep.subr.bf16.mxu0 0
        %437 = vmatpush1.bf16.msra.mxu0 %v417
        %438 = vmatprep.subr.bf16.mxu0 0
        %439 = vmatpush1.bf16.msra.mxu0 %v416
        %440 = vmatprep.subr.bf16.mxu0 0
        %441 = vmatpush2.bf16.msra.mxu0 0
        %442 = vmatprep.subr.bf16.mxu0 0
        %443 = vmatpush2.bf16.msra.mxu0 0
        %444 = vmatprep.subr.bf16.mxu0 0
        %445 = vmatpush2.bf16.msra.mxu0 0
        %446 = vmatprep.subr.bf16.mxu0 0
        %447 = vmatpush2.bf16.msra.mxu0 0
        %448 = vmatprep.subr.bf16.mxu0 0
        %449 = vmatpush2.bf16.msra.mxu0 0
        %450 = vmatprep.subr.bf16.mxu0 0
        %451 = vmatpush2.bf16.msra.mxu0 0
        %452 = vmatprep.subr.bf16.mxu0 0
        %453 = vmatpush2.bf16.msra.mxu0 0
        %454 = vmatprep.subr.bf16.mxu0 0
        %455 = vmatpush2.bf16.msra.mxu0 0
        %456 = vmatprep.mubr.bf16.mxu0 0
        %457 = vmatmul.mubr.bf16.gmra.mxu0 %v422
        %v458 = vpop.f32.mrf.mxu0
        %v459 = vadd.f32 0.0, %v458
        %v460 = vpop.f32.mrf.mxu0
        %v461 = vpop.f32.mrf.mxu0
        %v462 = vpop.f32.mrf.mxu0
        %463 = vdwg.mxu0
        %v464 = vld [vmem:[%s341] sm:$0xff]
        %v465 = vld [vmem:[%s341 + $0x8] sm:$0xff]
        %v466 = vld [vmem:[%s341 + $0x10] sm:$0xff]
        %v467 = vld [vmem:[%s341 + $0x18] sm:$0xff]
        %v468 = vld [vmem:[%s341 + $0x20] sm:$0xff]
        %v469 = vld [vmem:[%s341 + $0x28] sm:$0xff]
        %v470 = vld [vmem:[%s341 + $0x30] sm:$0xff]
        %v471 = vld [vmem:[%s341 + $0x38] sm:$0xff]
        %v472 = vpack.c.bf16 %v464, %v464
        %v473 = vpack.c.bf16 %v465, %v465
        %v474 = vpack.c.bf16 %v466, %v466
        %v475 = vpack.c.bf16 %v467, %v467
        %v476 = vpack.c.bf16 %v468, %v468
        %v477 = vpack.c.bf16 %v469, %v469
        %v478 = vpack.c.bf16 %v470, %v470
        %v479 = vpack.c.bf16 %v471, %v471
        %v480 = vld [vmem:[%s4] sm:$0xf]
        %v481 = vld [vmem:[%s4 + $0x4] sm:$0xf]
        %v482 = vld [vmem:[%s4 + $0x8] sm:$0xf]
        %v483 = vld [vmem:[%s4 + $0xc] sm:$0xf]
        %v492 = vunpack.c.l.b16 %v472
        %v493 = vunpack.c.l.b16 %v473
        %v494 = vunpack.c.l.b16 %v474
        %v495 = vunpack.c.l.b16 %v475
        %v496 = vunpack.c.l.b16 %v476
        %v497 = vunpack.c.l.b16 %v477
        %v498 = vunpack.c.l.b16 %v478
        %v499 = vunpack.c.l.b16 %v479
        %v500 = vpack.c.b16 %v493, %v492
        %v501 = vpack.c.b16 %v495, %v494
        %v502 = vpack.c.b16 %v497, %v496
        %v503 = vpack.c.b16 %v499, %v498
        %v508 = vunpack.c.l.b16 %v480
        %v509 = vunpack.c.l.b16 %v481
        %v510 = vunpack.c.l.b16 %v482
        %v511 = vunpack.c.l.b16 %v483
        %v512 = vpack.c.b16 %v509, %v508
        %v513 = vpack.c.b16 %v511, %v510
        %v517 = vsel %vm420, %v500, 0
        %v520 = vsel %vm420, %v501, 0
        %v523 = vsel %vm420, %v502, 0
        %v526 = vsel %vm420, %v503, 0
        %528 = vmatprep.subr.bf16.mxu0 0
        %529 = vmatpush1.bf16.msra.mxu0 0
        %530 = vmatprep.subr.bf16.mxu0 0
        %531 = vmatpush1.bf16.msra.mxu0 0
        %532 = vmatprep.subr.bf16.mxu0 0
        %533 = vmatpush1.bf16.msra.mxu0 0
        %534 = vmatprep.subr.bf16.mxu0 0
        %535 = vmatpush1.bf16.msra.mxu0 0
        %536 = vmatprep.subr.bf16.mxu0 0
        %537 = vmatpush1.bf16.msra.mxu0 0
        %538 = vmatprep.subr.bf16.mxu0 0
        %539 = vmatpush1.bf16.msra.mxu0 0
        %540 = vmatprep.subr.bf16.mxu0 0
        %541 = vmatpush1.bf16.msra.mxu0 %v513
        %542 = vmatprep.subr.bf16.mxu0 0
        %543 = vmatpush1.bf16.msra.mxu0 %v512
        %544 = vmatprep.subr.bf16.mxu0 0
        %545 = vmatpush2.bf16.msra.mxu0 0
        %546 = vmatprep.subr.bf16.mxu0 0
        %547 = vmatpush2.bf16.msra.mxu0 0
        %548 = vmatprep.subr.bf16.mxu0 0
        %549 = vmatpush2.bf16.msra.mxu0 0
        %550 = vmatprep.subr.bf16.mxu0 0
        %551 = vmatpush2.bf16.msra.mxu0 0
        %552 = vmatprep.subr.bf16.mxu0 0
        %553 = vmatpush2.bf16.msra.mxu0 0
        %554 = vmatprep.subr.bf16.mxu0 0
        %555 = vmatpush2.bf16.msra.mxu0 0
        %556 = vmatprep.subr.bf16.mxu0 0
        %557 = vmatpush2.bf16.msra.mxu0 0
        %558 = vmatprep.subr.bf16.mxu0 0
        %559 = vmatpush2.bf16.msra.mxu0 0
        %560 = vmatprep.mubr.bf16.mxu0 0
        %561 = vmatmul.mubr.bf16.gmra.mxu0 %v517
        %v562 = vpop.f32.mrf.mxu0
        %v563 = vadd.f32 0.0, %v562
        %v564 = vpop.f32.mrf.mxu0
        %v565 = vpop.f32.mrf.mxu0
        %v566 = vadd.f32 0.0, %v565
        %v567 = vpop.f32.mrf.mxu0
        %568 = vmatprep.mubr.bf16.mxu0 0
        %569 = vmatmul.mubr.bf16.gmra.mxu0 %v520
        %v570 = vpop.f32.mrf.mxu0
        %v571 = vadd.f32 0.0, %v570
        %v572 = vpop.f32.mrf.mxu0
        %v573 = vpop.f32.mrf.mxu0
        %v574 = vadd.f32 0.0, %v573
        %v575 = vpop.f32.mrf.mxu0
        %576 = vmatprep.mubr.bf16.mxu0 0
        %577 = vmatmul.mubr.bf16.gmra.mxu0 %v523
        %v578 = vpop.f32.mrf.mxu0
        %v579 = vadd.f32 0.0, %v578
        %v580 = vpop.f32.mrf.mxu0
        %v581 = vpop.f32.mrf.mxu0
        %v582 = vadd.f32 0.0, %v581
        %v583 = vpop.f32.mrf.mxu0
        %584 = vmatprep.mubr.bf16.mxu0 0
        %585 = vmatmul.mubr.bf16.gmra.mxu0 %v526
        %v586 = vpop.f32.mrf.mxu0
        %v587 = vadd.f32 0.0, %v586
        %v588 = vpop.f32.mrf.mxu0
        %v589 = vpop.f32.mrf.mxu0
        %v590 = vadd.f32 0.0, %v589
        %v591 = vpop.f32.mrf.mxu0
        %592 = vdwg.mxu0
        %v593 = vadd.f32 %v459, %v563
        %v594 = vadd.f32 %v459, %v566
        %v595 = vadd.f32 %v459, %v571
        %v596 = vadd.f32 %v459, %v574
        %v597 = vadd.f32 %v459, %v579
        %v598 = vadd.f32 %v459, %v582
        %v599 = vadd.f32 %v459, %v587
        %v600 = vadd.f32 %v459, %v590
        %v601 = vld [vmem:[%s6] sm:$0x1]
        %v603 = vlaneseq
        %v604 = vshrl.u32 %v603, 7
        %v605 = vsub.s32 0, %v604
        %v606 = vrot.slane %v601, %v605
        %v608 = vadd.f32 %v593, %v606
        %v609 = vadd.f32 %v594, %v606
        %v610 = vadd.f32 %v595, %v606
        %v611 = vadd.f32 %v596, %v606
        %v612 = vadd.f32 %v597, %v606
        %v613 = vadd.f32 %v598, %v606
        %v614 = vadd.f32 %v599, %v606
        %v615 = vadd.f32 %v600, %v606
        %v616 = vtanh.pop %v608
        %v617 = vtanh.pop %v609
        %v618 = vtanh.pop %v610
        %v619 = vtanh.pop %v611
        %v620 = vtanh.pop %v612
        %v621 = vtanh.pop %v613
        %v622 = vtanh.pop %v614
        %v623 = vtanh.pop %v615
        %v624 = vld [vmem:[%s5] sm:$0x1]
        %v626 = vlaneseq
        %v627 = vshrl.u32 %v626, 7
        %v628 = vsub.s32 0, %v627
        %v629 = vrot.slane %v624, %v628
        %v631 = vmul.f32 %v629, %v616
        %v632 = vmul.f32 %v629, %v617
        %v633 = vmul.f32 %v629, %v618
        %v634 = vmul.f32 %v629, %v619
        %v635 = vmul.f32 %v629, %v620
        %v636 = vmul.f32 %v629, %v621
        %v637 = vmul.f32 %v629, %v622
        %v638 = vmul.f32 %v629, %v623
        %v639 = vsel %vm420, %v631, 0.0
        %640 = vadd.xlane.f32.xlu0 %v639
        %v641 = vpop.xlane.xlu0 %640
        %v642 = vsel %vm420, %v632, 0.0
        %643 = vadd.xlane.f32.xlu0 %v642
        %v644 = vpop.xlane.xlu0 %643
        %v645 = vsel %vm420, %v633, 0.0
        %646 = vadd.xlane.f32.xlu0 %v645
        %v647 = vpop.xlane.xlu0 %646
        %v648 = vsel %vm420, %v634, 0.0
        %649 = vadd.xlane.f32.xlu0 %v648
        %v650 = vpop.xlane.xlu0 %649
        %v651 = vsel %vm420, %v635, 0.0
        %652 = vadd.xlane.f32.xlu0 %v651
        %v653 = vpop.xlane.xlu0 %652
        %v654 = vsel %vm420, %v636, 0.0
        %655 = vadd.xlane.f32.xlu0 %v654
        %v656 = vpop.xlane.xlu0 %655
        %v657 = vsel %vm420, %v637, 0.0
        %658 = vadd.xlane.f32.xlu0 %v657
        %v659 = vpop.xlane.xlu0 %658
        %v660 = vsel %vm420, %v638, 0.0
        %661 = vadd.xlane.f32.xlu0 %v660
        %v662 = vpop.xlane.xlu0 %661
        %v663 = vld [vmem:[%s387] sm:$0xff]
        %vm664 = vcmp.gt.f32.partialorder %v663, 0.5
        %v673 = vlaneseq
        %v674 = vand.u32 %v673, 127
        %v675 = vlaneseq
        %v676 = vshrl.u32 %v675, 7
        %v677 = vsub.s32 %v674, %v676
        %v678 = vrot.slane %v641, %v677
        %v679 = vlaneseq
        %v680 = vshrl.u32 %v679, 7
        %v681 = vsub.s32 %v674, %v680
        %v682 = vrot.slane %v644, %v681
        %v683 = vlaneseq
        %v684 = vshrl.u32 %v683, 7
        %v685 = vsub.s32 %v674, %v684
        %v686 = vrot.slane %v647, %v685
        %v687 = vlaneseq
        %v688 = vshrl.u32 %v687, 7
        %v689 = vsub.s32 %v674, %v688
        %v690 = vrot.slane %v650, %v689
        %v691 = vlaneseq
        %v692 = vshrl.u32 %v691, 7
        %v693 = vsub.s32 %v674, %v692
        %v694 = vrot.slane %v653, %v693
        %v695 = vlaneseq
        %v696 = vshrl.u32 %v695, 7
        %v697 = vsub.s32 %v674, %v696
        %v698 = vrot.slane %v656, %v697
        %v699 = vlaneseq
        %v700 = vshrl.u32 %v699, 7
        %v701 = vsub.s32 %v674, %v700
        %v702 = vrot.slane %v659, %v701
        %v703 = vlaneseq
        %v704 = vshrl.u32 %v703, 7
        %v705 = vsub.s32 %v674, %v704
        %v706 = vrot.slane %v662, %v705
        %vm707 = vcmask 1041409
        %v708 = vsel %vm707, %v682, %v678
        %vm709 = vcmask 1042434
        %v710 = vsel %vm709, %v686, %v708
        %vm711 = vcmask 1043459
        %v712 = vsel %vm711, %v690, %v710
        %vm713 = vcmask 1044484
        %v714 = vsel %vm713, %v694, %v712
        %vm715 = vcmask 1045509
        %v716 = vsel %vm715, %v698, %v714
        %vm717 = vcmask 1046534
        %v718 = vsel %vm717, %v702, %v716
        %vm719 = vcmask 1047559
        %v720 = vsel %vm719, %v706, %v718
        %v722 = vsel %vm664, -1e+30, %v720
        %s723 = smul.u32 %s30, 8
        %s724 = scalar_lea.vmem %s391, %s723
        %vm725 = vcmask 64512
        %726 = vst.msk [vmem:[%s724] sm:$0xff] %vm725, %v722
        %v727 = vld [vmem:[#allocation2] sm:$0x1]
        %v728 = vsel %vm725, %v722, -inf
        %v729 = vrot.slane %v728, 4
        %v730 = vmax.f32 %v728, %v729
        %v731 = vrot.slane %v730, 2
        %v732 = vmax.f32 %v730, %v731
        %v733 = vrot.slane %v732, 1
        %v734 = vmax.f32 %v732, %v733
        %v735 = vmax.f32 %v727, %v734
        %v736 = vsub.f32 %v727, %v735
        %v737 = vmul.f32 %v736, 1.442695
        %v738 = vpow.pop %v737
        %v740 = vlaneseq
        %v741 = vshrl.u32 %v740, 7
        %v742 = vsub.s32 0, %v741
        %v743 = vrot.slane %v735, %v742
        %v745 = vsub.f32 %v722, %v743
        %v746 = vmul.f32 %v745, 1.442695
        %v747 = vpow.pop %v746
        %v748 = vld [vmem:[#allocation3] sm:$0x1]
        %v749 = vmul.f32 %v738, %v748
        %v750 = vsel %vm725, %v747, 0.0
        %v751 = vrot.slane %v750, 4
        %v752 = vadd.f32 %v750, %v751
        %v753 = vrot.slane %v752, 2
        %v754 = vadd.f32 %v752, %v753
        %v755 = vrot.slane %v754, 1
        %v756 = vadd.f32 %v754, %v755
        %v757 = vadd.f32 %v749, %v756
        %vm758 = vcmask 57344
        %759 = vst.msk [vmem:[#allocation3] sm:$0x1] %vm758, %v757
        %760 = vst.msk [vmem:[#allocation2] sm:$0x1] %vm758, %v735
        %v761 = vlaneseq
        %v762 = vshrl.u32 %v761, 7
        %v763 = vsub.s32 0, %v762
        %v764 = vrot.slane %v747, %v763
        %766 = vbcast.lane.b32.xlu0 %v764, 256
        %v767 = vpop.permute.xlu0 %766
        %v768 = vlaneseq
        %v769 = vshrl.u32 %v768, 7
        %v770 = vsub.s32 1, %v769
        %v771 = vrot.slane %v747, %v770
        %773 = vbcast.lane.b32.xlu0 %v771, 256
        %v774 = vpop.permute.xlu0 %773
        %v775 = vlaneseq
        %v776 = vshrl.u32 %v775, 7
        %v777 = vsub.s32 2, %v776
        %v778 = vrot.slane %v747, %v777
        %780 = vbcast.lane.b32.xlu0 %v778, 256
        %v781 = vpop.permute.xlu0 %780
        %v782 = vlaneseq
        %v783 = vshrl.u32 %v782, 7
        %v784 = vsub.s32 3, %v783
        %v785 = vrot.slane %v747, %v784
        %787 = vbcast.lane.b32.xlu0 %v785, 256
        %v788 = vpop.permute.xlu0 %787
        %v789 = vlaneseq
        %v790 = vshrl.u32 %v789, 7
        %v791 = vsub.s32 4, %v790
        %v792 = vrot.slane %v747, %v791
        %794 = vbcast.lane.b32.xlu0 %v792, 256
        %v795 = vpop.permute.xlu0 %794
        %v796 = vlaneseq
        %v797 = vshrl.u32 %v796, 7
        %v798 = vsub.s32 5, %v797
        %v799 = vrot.slane %v747, %v798
        %801 = vbcast.lane.b32.xlu0 %v799, 256
        %v802 = vpop.permute.xlu0 %801
        %v803 = vlaneseq
        %v804 = vshrl.u32 %v803, 7
        %v805 = vsub.s32 6, %v804
        %v806 = vrot.slane %v747, %v805
        %808 = vbcast.lane.b32.xlu0 %v806, 256
        %v809 = vpop.permute.xlu0 %808
        %v810 = vlaneseq
        %v811 = vshrl.u32 %v810, 7
        %v812 = vsub.s32 7, %v811
        %v813 = vrot.slane %v747, %v812
        %815 = vbcast.lane.b32.xlu0 %v813, 256
        %v816 = vpop.permute.xlu0 %815
        %v817 = vmul.f32 %v767, %v464
        %v818 = vmul.f32 %v774, %v465
        %v819 = vmul.f32 %v781, %v466
        %v820 = vmul.f32 %v788, %v467
        %v821 = vmul.f32 %v795, %v468
        %v822 = vmul.f32 %v802, %v469
        %v823 = vmul.f32 %v809, %v470
        %v824 = vmul.f32 %v816, %v471
        %v825 = vsel %vm420, %v817, 0.0
        %v826 = vsel %vm420, %v818, 0.0
        %v827 = vadd.f32 %v825, %v826
        %v828 = vsel %vm420, %v819, 0.0
        %v829 = vadd.f32 %v827, %v828
        %v830 = vsel %vm420, %v820, 0.0
        %v831 = vadd.f32 %v829, %v830
        %v832 = vsel %vm420, %v821, 0.0
        %v833 = vadd.f32 %v831, %v832
        %v834 = vsel %vm420, %v822, 0.0
        %v835 = vadd.f32 %v833, %v834
        %v836 = vsel %vm420, %v823, 0.0
        %v837 = vadd.f32 %v835, %v836
        %v838 = vsel %vm420, %v824, 0.0
        %v839 = vadd.f32 %v837, %v838
        %v840 = vlaneseq
        %v841 = vshrl.u32 %v840, 7
        %vm842 = vcmp.eq.s32.totalorder %v841, %v674
        %v844 = vlaneseq
        %v845 = vshrl.u32 %v844, 7
        %v846 = vsub.s32 0, %v845
        %v847 = vrot.slane %v738, %v846
        %v849 = vsel %vm842, %v847, 0.0
        %v850 = vsel %vm725, %v849, 0.0
        %851 = vadd.xlane.f32.xlu0 %v850
        %v852 = vpop.xlane.xlu0 %851
        %v853 = vld [vmem:[#allocation4] sm:$0xff]
        %v854 = vmul.f32 %v852, %v853
        %v855 = vadd.f32 %v854, %v839
        %856 = vst.msk [vmem:[#allocation4] sm:$0xff] %vm420, %v855
        %p857 = scmp.eq.s32.totalorder %s30, 2
        // Predicated region
        $region61: #{tpu_custom_call.1} parent=47 // pred_check
          %p858 = pneg %p857
        $region62: #{tpu_custom_call.1} parent=47 // pred_check_branch
          %860 = sbr.rel (%p858) target = $region64
        $region63: #{tpu_custom_call.1} parent=47 // pred_region
          %v861 = vld [vmem:[#allocation3] sm:$0x1]
          %v862 = vrcp.pop %v861
          %v863 = vld [vmem:[%s391] sm:$0xff]
          %v864 = vld [vmem:[%s391 + $0x8] sm:$0xff]
          %v865 = vld [vmem:[%s391 + $0x10] sm:$0xff]
          %v866 = vld [vmem:[#allocation2] sm:$0x1]
          %v868 = vlaneseq
          %v869 = vshrl.u32 %v868, 7
          %v870 = vsub.s32 0, %v869
          %v871 = vrot.slane %v866, %v870
          %v873 = vsub.f32 %v863, %v871
          %v874 = vsub.f32 %v864, %v871
          %v875 = vsub.f32 %v865, %v871
          %v876 = vmul.f32 %v873, 1.442695
          %v877 = vpow.pop %v876
          %v878 = vmul.f32 %v874, 1.442695
          %v879 = vpow.pop %v878
          %v880 = vmul.f32 %v875, 1.442695
          %v881 = vpow.pop %v880
          %v883 = vlaneseq
          %v884 = vshrl.u32 %v883, 7
          %v885 = vsub.s32 0, %v884
          %v886 = vrot.slane %v862, %v885
          %v888 = vmul.f32 %v877, %v886
          %v889 = vmul.f32 %v879, %v886
          %v890 = vmul.f32 %v881, %v886
          %891 = vst.msk [vmem:[%s391] sm:$0xff] %vm725, %v888
          %892 = vst.msk [vmem:[%s391 + $0x8] sm:$0xff] %vm725, %v889
          %893 = vst.msk [vmem:[%s391 + $0x10] sm:$0xff] %vm725, %v890
          %v894 = vld [vmem:[#allocation4] sm:$0xff]
          %v895 = vsel %vm842, %v886, 0.0
          %v896 = vsel %vm725, %v895, 0.0
          %897 = vadd.xlane.f32.xlu0 %v896
          %v898 = vpop.xlane.xlu0 %897
          %v899 = vmul.f32 %v894, %v898
          %900 = vst.msk [vmem:[#allocation10] sm:$0xff] %vm420, %v899
        $region64: #{tpu_custom_call.1} parent=47 // pred_fallthru
          _
        %p901 = scmp.lt.s32.totalorder %s29, 0
        %s902 = scalar_select %p901, %s29, 0
        %s903 = smul.addr %s902, 8
        %s904 = scalar_lea.vmem %s8, %s903
        // Predicated region
        $region65: #{tpu_custom_call.1} parent=47 // pred_check
          %p905 = pneg %p221
        $region66: #{tpu_custom_call.1} parent=47 // pred_check_branch
          %907 = sbr.rel (%p905) target = $region68
        $region67: #{tpu_custom_call.1} parent=47 // pred_region
          %s909 = ssub.s32 128, 128
          %910 = vsyncadd [#allocation7], %s909
          %s911 = smul.addr %s29, 128
          %s912 = scalar_lea.hbm %s7, %s911
          %s914 = sshll.u32 [#allocation10], 4
          %s915 = int_to_ptr.vmem [resolvable:$true] %s914
          %917 = dma.vmem_to_hbm [thread:$0]  %s915, 128, %s912, [#allocation7]
        $region68: #{tpu_custom_call.1} parent=47 // pred_fallthru
          _
        // Predicated region
        $region69: #{tpu_custom_call.1} parent=47 // pred_check
          %p918 = pneg %p247
        $region70: #{tpu_custom_call.1} parent=47 // pred_check_branch
          %920 = sbr.rel (%p918) target = $region72
        $region71: #{tpu_custom_call.1} parent=47 // pred_region
          _
        $region72: #{tpu_custom_call.1} parent=47 // pred_fallthru
          _
        // Predicated region
        $region73: #{tpu_custom_call.1} parent=47 // pred_check
          %p921 = pneg %p221
        $region74: #{tpu_custom_call.1} parent=47 // pred_check_branch
          %923 = sbr.rel (%p921) target = $region76
        $region75: #{tpu_custom_call.1} parent=47 // pred_region
          %924 = dma.done [#allocation7], 128
        $region76: #{tpu_custom_call.1} parent=47 // pred_fallthru
          _
        // Predicated region
        $region77: #{tpu_custom_call.1} parent=47 // pred_check
          %p925 = pneg %p247
        $region78: #{tpu_custom_call.1} parent=47 // pred_check_branch
          %927 = sbr.rel (%p925) target = $region80
        $region79: #{tpu_custom_call.1} parent=47 // pred_region
          %p928 = scmp.lt.s32.totalorder %s29, 0
          %s929 = scalar_select %p928, %s29, 0
          %s930 = smul.addr %s929, 8
          %s931 = scalar_lea.vmem %s8, %s930
        $region80: #{tpu_custom_call.1} parent=47 // pred_fallthru
          _
      $region48: #{tpu_custom_call.1} parent=5 // pred_fallthru
        _
      %p932 = scmp.le.s32.totalorder 2, %s20
      // Predicated region
      $region81: #{tpu_custom_call.1} parent=5 // pred_check
        %p933 = pneg %p932
      $region82: #{tpu_custom_call.1} parent=5 // pred_check_branch
        %935 = sbr.rel (%p933) target = $region84
      $region83: #{tpu_custom_call.1} parent=5 // pred_region
        %s936 = ssub.s32 %s20, 2
      $region84: #{tpu_custom_call.1} parent=5 // pred_fallthru
        _
    $region6: #{tpu_custom_call.1} parent=1 // loop_footer
      %s24 = sadd.s32 1, %s20
    $region7: #{tpu_custom_call.1} parent=1 // loop_footer_branch
      %19 = sbr.rel target = $region3
    $region8: #{tpu_custom_call.1} parent=1 // loop_exit
      _
    %937 = vsyncpa [#allocation6], 1
    %s938 = scalar_lea.sflag [#allocation6], 1
    %939 = vsyncpa %s938, 1
    %940 = vsyncpa [#allocation9], 1
    %s941 = scalar_lea.sflag [#allocation9], 1
    %942 = vsyncpa %s941, 1
    %943 = vsyncpa [#allocation7], 1
    %s944 = scalar_lea.sflag [#allocation7], 1
    %945 = vsyncpa %s944, 1

</llo_original>
